<compile_context>
chip_gen: v7x
topology: tpu7x:2x2x1
jax: 0.10.0
libtpu: 0.0.40
codegen_flags: <defaults>
</compile_context>

<pallas_src>
import functools

import jax
import jax.numpy as jnp
from jax import lax
from jax.experimental import pallas as pl
from jax.experimental.pallas import tpu as pltpu


def _round_up(x: int, m: int) -> int:
    return ((x + m - 1) // m) * m


def _sublane(dtype) -> int:
    # Sublane packing: 8 rows for 4-byte, 16 for 2-byte, 32 for 1-byte dtypes.
    return {4: 8, 2: 16, 1: 32}.get(jnp.dtype(dtype).itemsize, 8)


# ---------------------------------------------------------------------------
# Prologue: row-normalize x / max(||x||, eps), optionally casting to a
# narrower MXU operand dtype.  One mem-bound pass per matrix.
# ---------------------------------------------------------------------------
def _normalize_rows_kernel(x_ref, o_ref, *, eps):
    x = x_ref[...].astype(jnp.float32)
    ssq = jnp.sum(x * x, axis=1, keepdims=True)                  # (T, 1)
    inv = lax.rsqrt(jnp.maximum(ssq, jnp.float32(eps * eps)))    # EUP rsqrt
    o_ref[...] = (x * inv).astype(o_ref.dtype)


def _normalize_rows(x, tile, out_dtype, eps, vmem_limit):
    rows, d = x.shape
    return pl.pallas_call(
        functools.partial(_normalize_rows_kernel, eps=eps),
        out_shape=jax.ShapeDtypeStruct((rows, d), out_dtype),
        grid_spec=pltpu.PrefetchScalarGridSpec(
            num_scalar_prefetch=0,
            grid=(rows // tile,),
            in_specs=[pl.BlockSpec((tile, d), lambda i: (i, 0))],
            out_specs=pl.BlockSpec((tile, d), lambda i: (i, 0)),
        ),
        compiler_params=pltpu.CompilerParams(
            dimension_semantics=("parallel",),
            vmem_limit_bytes=vmem_limit,
        ),
    )(x)


# ---------------------------------------------------------------------------
# Main kernel: one (TR, TC) output tile = A_tile (TR, D) . B_tile (TC, D)^T.
# Operands are pre-normalized; a single MXU pass with f32 accumulation and no
# normalization / transpose / divide work in the hot loop.
# ---------------------------------------------------------------------------
def _cosine_matmul_kernel(a_ref, b_ref, o_ref):
    o_ref[...] = lax.dot_general(
        a_ref[...],
        b_ref[...],
        dimension_numbers=(((1,), (1,)), ((), ())),   # contract both on D
        preferred_element_type=jnp.float32,
    ).astype(o_ref.dtype)


def cosine_similarity(
    x1: jax.Array,
    x2: jax.Array,
    *,
    tr: int | None = None,          # tile over N (output rows)
    tc: int | None = None,          # tile over M (output cols)
    operand_dtype=None,             # e.g. jnp.bfloat16: fast-MXU opt-in path
    out_dtype=jnp.float32,
    eps: float = 1e-8,
) -> jax.Array:
    """Pairwise cosine similarity between rows of x1 (N, D) and x2 (M, D)."""
    assert x1.ndim == 2 and x2.ndim == 2 and x1.shape[1] == x2.shape[1]
    N, D = x1.shape
    M, _ = x2.shape

    op_dtype = jnp.dtype(operand_dtype) if operand_dtype is not None else jnp.dtype(x1.dtype)
    out_dtype = jnp.dtype(out_dtype)
    op_b, out_b = op_dtype.itemsize, out_dtype.itemsize
    in_b = max(jnp.dtype(x1.dtype).itemsize, jnp.dtype(x2.dtype).itemsize)

    row_align = max(_sublane(op_dtype), _sublane(out_dtype))

    # Grid orientation: the LARGER matrix goes on the outer (cached) axis,
    # the smaller one is the re-streamed inner operand.
    rows_outer = N >= M
    auto_tiles = tr is None and tc is None
    if tr is None:
        tr = _round_up(min(512 if rows_outer else 256, _round_up(N, row_align)), row_align)
    if tc is None:
        tc = _round_up(min(256 if rows_outer else 512, _round_up(M, 128)), 128)
    assert tr % row_align == 0, f"tr must be a multiple of {row_align} for this dtype combo"
    assert tc % 128 == 0, "tc must be a multiple of 128 (lane-dense output)"

    # Double-buffered VMEM footprint (main matmul and the worst-case prologue).
    def vmem_need(tr_, tc_):
        main = 2 * tr_ * D * op_b + 2 * tc_ * D * op_b + 2 * tr_ * tc_ * out_b
        prol = 2 * max(tr_, tc_) * D * (in_b + op_b)
        return max(main, prol)

    if auto_tiles:
        budget = 32 * 1024 * 1024
        while vmem_need(tr, tc) > budget:
            if tc > 128 and tc >= tr:
                tc = max(128, _round_up(tc // 2, 128))
            elif tr > row_align:
                tr = max(row_align, _round_up(tr // 2, row_align))
            else:
                break  # minimal tiles; very large D would call for K-tiling instead

    vmem_limit = int(min(64 * 1024 * 1024,
                         max(32 * 1024 * 1024, (vmem_need(tr, tc) * 5) // 4)))

    # Pad to tile multiples only when needed; padded rows are zero and the eps
    # floor keeps their normalized form zero, so they never produce NaNs.
    Np = _round_up(N, tr)
    Mp = _round_up(M, tc)
    x1p = jnp.pad(x1, ((0, Np - N), (0, 0))) if Np != N else x1
    x2p = jnp.pad(x2, ((0, Mp - M), (0, 0))) if Mp != M else x2

    # Prologue: normalize each matrix once (one mem-bound pass each).
    x1n = _normalize_rows(x1p, tr, op_dtype, eps, vmem_limit)
    x2n = _normalize_rows(x2p, tc, op_dtype, eps, vmem_limit)

    # Main tiled matmul over the normalized operands.
    if rows_outer:
        grid = (Np // tr, Mp // tc)                           # outer: N (cached x1n)
        a_spec = pl.BlockSpec((tr, D), lambda i, j: (i, 0))   # fixed per outer step
        b_spec = pl.BlockSpec((tc, D), lambda i, j: (j, 0))   # re-streamed inner
        o_spec = pl.BlockSpec((tr, tc), lambda i, j: (i, j))
    else:
        grid = (Mp // tc, Np // tr)                           # outer: M (cached x2n)
        a_spec = pl.BlockSpec((tr, D), lambda j, i: (i, 0))   # re-streamed inner
        b_spec = pl.BlockSpec((tc, D), lambda j, i: (j, 0))   # fixed per outer step
        o_spec = pl.BlockSpec((tr, tc), lambda j, i: (i, j))

    out = pl.pallas_call(
        _cosine_matmul_kernel,
        out_shape=jax.ShapeDtypeStruct((Np, Mp), out_dtype),
        grid_spec=pltpu.PrefetchScalarGridSpec(
            num_scalar_prefetch=0,
            grid=grid,
            in_specs=[a_spec, b_spec],
            out_specs=o_spec,
        ),
        compiler_params=pltpu.CompilerParams(
            dimension_semantics=("parallel", "parallel"),
            vmem_limit_bytes=vmem_limit,
        ),
    )(x1n, x2n)

    if Np != N or Mp != M:
        out = out[:N, :M]
    return out


def _reference(x1, x2, eps=1e-8):
    x1f = x1.astype(jnp.float32)
    x2f = x2.astype(jnp.float32)
    n1 = jnp.maximum(jnp.linalg.norm(x1f, axis=1, keepdims=True), eps)   # (N, 1)
    n2 = jnp.maximum(jnp.linalg.norm(x2f, axis=1, keepdims=True), eps)   # (M, 1)
    return (x1f @ x2f.T) / (n1 * n2.T)


if __name__ == "__main__":
    key = jax.random.PRNGKey(0)
    k1, k2 = jax.random.split(key)

    # Small, non-tile-aligned shapes so multi-tile, padding and both grid
    # orientations get exercised.
    N, M, D = 160, 200, 64
    x1 = jax.random.normal(k1, (N, D), dtype=jnp.float32)
    x2 = jax.random.normal(k2, (M, D), dtype=jnp.float32)
    ref = _reference(x1, x2)

    # (a) explicit small tiles: M > N -> cols-outer orientation, grid (2, 3);
    #     pads both operands and uses the cached outer block across the sweep.
    out = jax.block_until_ready(cosine_similarity(x1, x2, tr=64, tc=128))
    assert out.shape == (N, M)
    err = float(jnp.max(jnp.abs(out - ref)))
    assert jnp.allclose(out, ref, atol=2e-5, rtol=2e-5), f"max err {err}"

    # (b) default (auto) tiles.
    out2 = jax.block_until_ready(cosine_similarity(x1, x2))
    assert jnp.allclose(out2, ref, atol=2e-5, rtol=2e-5)

    # (c) swapped arguments: N >= M -> rows-outer orientation.
    out3 = jax.block_until_ready(cosine_similarity(x2, x1, tr=64, tc=128))
    assert jnp.allclose(out3, ref.T, atol=2e-5, rtol=2e-5)

    # (d) opt-in bf16 MXU-operand path (f32 accumulation); looser tolerance.
    out4 = jax.block_until_ready(
        cosine_similarity(x1, x2, operand_dtype=jnp.bfloat16))
    assert float(jnp.max(jnp.abs(out4 - ref))) < 2e-2

    print("KERNEL_OK")
</pallas_src>

<mosaic_0001>
module attributes {stable_mosaic.version = 11 : i64} {
  func.func @_normalize_rows_kernel(%arg0: i32, %arg1: memref<64x64xf32, #tpu.memory_space<vmem>>, %arg2: memref<64x64xf32, #tpu.memory_space<vmem>>) attributes {dimension_semantics = [#tpu.dimension_semantics<parallel>], iteration_bounds = array<i64: 3>, scalar_prefetch = 0 : i64, scratch_operands = 0 : i64, tpu.core_type = #tpu.core_type<tc>, window_params = [{transform_indices = @transform_0, window_bounds = array<i64: 64, 64>}, {transform_indices = @transform_1, window_bounds = array<i64: 64, 64>}]} {
    %c0 = arith.constant 0 : index
    %c0_0 = arith.constant 0 : index
    %0 = vector.load %arg1[%c0, %c0_0] : memref<64x64xf32, #tpu.memory_space<vmem>>, vector<64x64xf32>
    %1 = arith.mulf %0, %0 : vector<64x64xf32>
    %cst = arith.constant dense<0.000000e+00> : vector<64xf32>
    %2 = vector.multi_reduction <add>, %1, %cst [1] : vector<64x64xf32> to vector<64xf32>
    %3 = vector.shape_cast %2 : vector<64xf32> to vector<64x1xf32>
    %cst_1 = arith.constant 1.000000e-16 : f32
    %4 = vector.broadcast %cst_1 : f32 to vector<64x1xf32>
    %5 = arith.maximumf %3, %4 : vector<64x1xf32>
    %6 = math.rsqrt %5 : vector<64x1xf32>
    %7 = vector.broadcast %6 : vector<64x1xf32> to vector<64x64xf32>
    %8 = arith.mulf %0, %7 : vector<64x64xf32>
    %c0_2 = arith.constant 0 : index
    %c0_3 = arith.constant 0 : index
    %9 = vector.load %arg2[%c0_2, %c0_3] : memref<64x64xf32, #tpu.memory_space<vmem>>, vector<64x64xf32>
    tpu.vector_store %arg2[%c0_2, %c0_3], %8 {strides = array<i32>} : memref<64x64xf32, #tpu.memory_space<vmem>>, vector<64x64xf32>,
    return
  }
  func.func @transform_0(%arg0: i32) -> (i32, i32) {
    %c0_i32 = arith.constant 0 : i32
    %c0_i32_0 = arith.constant 0 : i32
    return %arg0, %c0_i32 : i32, i32
  }
  func.func @transform_1(%arg0: i32) -> (i32, i32) {
    %c0_i32 = arith.constant 0 : i32
    %c0_i32_0 = arith.constant 0 : i32
    return %arg0, %c0_i32 : i32, i32
  }
}

</mosaic_0001>

<llo_original>
// kernel: tpu_custom_call.1
$region0: #{tpu_custom_call.1}
  #allocation0 [shape = 'u32[]', space=smem, size = 0x4, offset = 0x4, fixed_abs, tag = 'smem constant byte address 0x4 - core index']
  #allocation1 [shape = 'u32[144,128]{1,0:T(1,128)}', space=vmem, size = 0x12000, scoped, tag = 'internal scratch']
  %s0 = inlined_call_operand.vmem [shape: f32[192,64], index: 0, kind: input, shape index: {}]
  %s1 = inlined_call_operand.vmem [shape: f32[192,64], index: 1, kind: output, shape index: {}]
  %s2 = sld [smem:[#allocation0]]
  $region37: #{tpu_custom_call.1} parent=0
    _
  %s4 = ssub.s32 1, %s2
  %s5 = scalar_select 0, %s4, %s2
  loop: start=0, step=1, limit=5
  $region2: #{tpu_custom_call.1} parent=0 // loop_pre_header
    _
  $region3: #{tpu_custom_call.1} parent=0 // loop_header
    %s7 = sphi 0, %s11
    %p8 = scmp.ge.s32.totalorder %s7, 5
    %s17 = sphi 0, %s19
    %s20 = sphi 0, %s17
    %s21 = sphi 0, %s20
    %s37 = sphi 0, %s21
    %s43 = sphi 0, %s45
    %s46 = sphi 0, %s43
    %s47 = sphi 0, %s46
    %s63 = sphi 0, %s47
  $region4: #{tpu_custom_call.1} parent=0 // loop_header_branch
    %10 = sbr.rel (%p8) target = $region8
  $region5: #{tpu_custom_call.1} parent=0 // loop_body
    %s12 = ssub.s32 %s7, 1
    %s13 = ssub.s32 %s7, 2
    %s14 = sadd.s32 %s7, 1
    %s15 = ssub.s32 %s7, %s14
    %p16 = scmp.eq.s32.totalorder %s15, 0
    %s18 = sadd.s32 %s17, 1
    %s19 = scalar_select %p16, %s17, %s18
    %p22 = pneg %p16
    %p23 = scmp.eq.s32.totalorder %s7, 2
    %p24 = por %p22, %p23
    %p25 = scmp.ne.s32.totalorder %s17, %s20
    %p26 = scmp.eq.s32.totalorder %s7, 0
    %p27 = por %p25, %p26
    %p28 = scmp.ne.s32.totalorder %s17, %s20
    %p29 = scmp.eq.s32.totalorder %s12, 2
    %p30 = por %p28, %p29
    %p31 = scmp.ne.s32.totalorder %s20, %s21
    %p32 = scmp.eq.s32.totalorder %s12, 0
    %p33 = por %p31, %p32
    %p34 = scmp.ne.s32.totalorder %s20, %s21
    %p35 = scmp.eq.s32.totalorder %s13, 2
    %p36 = por %p34, %p35
    %p38 = scmp.ne.s32.totalorder %s21, %s37
    %p39 = scmp.eq.s32.totalorder %s13, 0
    %p40 = por %p38, %p39
    %s41 = ssub.s32 %s7, %s14
    %p42 = scmp.eq.s32.totalorder %s41, 0
    %s44 = sadd.s32 %s43, 1
    %s45 = scalar_select %p42, %s43, %s44
    %p48 = pneg %p42
    %p49 = scmp.eq.s32.totalorder %s7, 2
    %p50 = por %p48, %p49
    %p51 = scmp.ne.s32.totalorder %s43, %s46
    %p52 = scmp.eq.s32.totalorder %s7, 0
    %p53 = por %p51, %p52
    %p54 = scmp.ne.s32.totalorder %s43, %s46
    %p55 = scmp.eq.s32.totalorder %s12, 2
    %p56 = por %p54, %p55
    %p57 = scmp.ne.s32.totalorder %s46, %s47
    %p58 = scmp.eq.s32.totalorder %s12, 0
    %p59 = por %p57, %p58
    %p60 = scmp.ne.s32.totalorder %s46, %s47
    %p61 = scmp.eq.s32.totalorder %s13, 2
    %p62 = por %p60, %p61
    %p64 = scmp.ne.s32.totalorder %s47, %s63
    %p65 = scmp.eq.s32.totalorder %s13, 0
    %p66 = por %p64, %p65
    %p67 = scmp.le.s32.totalorder 1, %s7
    %p68 = scmp.lt.s32.totalorder %s7, 4
    %p69 = pnand %p67, %p68
    %p70 = pneg %p69
    // Predicated region
    $region9: #{tpu_custom_call.1} parent=5 // pred_check
      _
    $region10: #{tpu_custom_call.1} parent=5 // pred_check_branch
      %72 = sbr.rel (%p69) target = $region12
    $region11: #{tpu_custom_call.1} parent=5 // pred_region
      %s73 = ssub.s32 %s7, 1
    $region12: #{tpu_custom_call.1} parent=5 // pred_fallthru
      _
    %p74 = scmp.lt.s32.totalorder %s7, 3
    // Predicated region
    $region13: #{tpu_custom_call.1} parent=5 // pred_check
      %p75 = pneg %p74
    $region14: #{tpu_custom_call.1} parent=5 // pred_check_branch
      %77 = sbr.rel (%p75) target = $region16
    $region15: #{tpu_custom_call.1} parent=5 // pred_region
      // Predicated region
      $region17: #{tpu_custom_call.1} parent=15 // pred_check
        %p78 = pneg %p27
      $region18: #{tpu_custom_call.1} parent=15 // pred_check_branch
        %80 = sbr.rel (%p78) target = $region20
      $region19: #{tpu_custom_call.1} parent=15 // pred_region
        %s81 = smul.u32 8, %s7
        %p82 = scmp.lt.s32.totalorder %s81, 23
        %s83 = scalar_select %p82, %s81, 23
        %s84 = smul.addr %s83, 8
        %s85 = scalar_lea.vmem %s0, %s84
        %s86 = smul.u32 8, %s7
      $region20: #{tpu_custom_call.1} parent=15 // pred_fallthru
        _
    $region16: #{tpu_custom_call.1} parent=5 // pred_fallthru
      _
    %p87 = scmp.le.s32.totalorder 1, %s7
    %p88 = scmp.lt.s32.totalorder %s7, 4
    %p89 = pnand %p87, %p88
    %p90 = pneg %p89
    // Predicated region
    $region21: #{tpu_custom_call.1} parent=5 // pred_check
      _
    $region22: #{tpu_custom_call.1} parent=5 // pred_check_branch
      %92 = sbr.rel (%p89) target = $region24
    $region23: #{tpu_custom_call.1} parent=5 // pred_region
      %s93 = ssub.s32 %s7, 1
      %s94 = smul.u32 8, %s12
      %p95 = scmp.lt.s32.totalorder %s94, 23
      %s96 = scalar_select %p95, %s94, 23
      %s97 = smul.addr %s96, 8
      %s98 = scalar_lea.vmem %s0, %s97
      %p99 = pneg %p33
      %p100 = pneg %p30
      %p101 = pneg %p59
      %p102 = pneg %p56
      %s103 = smul.u32 8, %s12
      %p104 = scmp.lt.s32.totalorder %s103, 23
      %s105 = scalar_select %p104, %s103, 23
      %s106 = smul.addr %s105, 8
      %s107 = scalar_lea.vmem %s1, %s106
      %s108 = smul.u32 8, %s12
      %p109 = scmp.lt.s32.totalorder %s108, 23
      %s110 = scalar_select %p109, %s108, 23
      %s111 = smul.addr %s110, 8
      %s112 = scalar_lea.vmem %s0, %s111
      %s113 = smul.u32 8, %s12
      %s114 = smul.u32 8, %s12
      %p115 = scmp.lt.s32.totalorder %s114, 23
      %s116 = scalar_select %p115, %s114, 23
      %s117 = smul.addr %s116, 8
      %s118 = scalar_lea.vmem %s1, %s117
      %s119 = smul.u32 8, %s12
      %v120 = vld [vmem:[%s112] sm:$0xff]
      %v121 = vld [vmem:[%s112 + $0x8] sm:$0xff]
      %v122 = vld [vmem:[%s112 + $0x10] sm:$0xff]
      %v123 = vld [vmem:[%s112 + $0x18] sm:$0xff]
      %v124 = vld [vmem:[%s112 + $0x20] sm:$0xff]
      %v125 = vld [vmem:[%s112 + $0x28] sm:$0xff]
      %v126 = vld [vmem:[%s112 + $0x30] sm:$0xff]
      %v127 = vld [vmem:[%s112 + $0x38] sm:$0xff]
      %v128 = vmul.f32 %v120, %v120
      %v129 = vmul.f32 %v121, %v121
      %v130 = vmul.f32 %v122, %v122
      %v131 = vmul.f32 %v123, %v123
      %v132 = vmul.f32 %v124, %v124
      %v133 = vmul.f32 %v125, %v125
      %v134 = vmul.f32 %v126, %v126
      %v135 = vmul.f32 %v127, %v127
      %vm136 = vcmask 523264
      %v137 = vsel %vm136, %v128, 0.0
      %138 = vadd.xlane.f32.xlu0 %v137
      %v139 = vpop.xlane.xlu0 %138
      %v140 = vsel %vm136, %v129, 0.0
      %141 = vadd.xlane.f32.xlu0 %v140
      %v142 = vpop.xlane.xlu0 %141
      %v143 = vsel %vm136, %v130, 0.0
      %144 = vadd.xlane.f32.xlu0 %v143
      %v145 = vpop.xlane.xlu0 %144
      %v146 = vsel %vm136, %v131, 0.0
      %147 = vadd.xlane.f32.xlu0 %v146
      %v148 = vpop.xlane.xlu0 %147
      %v149 = vsel %vm136, %v132, 0.0
      %150 = vadd.xlane.f32.xlu0 %v149
      %v151 = vpop.xlane.xlu0 %150
      %v152 = vsel %vm136, %v133, 0.0
      %153 = vadd.xlane.f32.xlu0 %v152
      %v154 = vpop.xlane.xlu0 %153
      %v155 = vsel %vm136, %v134, 0.0
      %156 = vadd.xlane.f32.xlu0 %v155
      %v157 = vpop.xlane.xlu0 %156
      %v158 = vsel %vm136, %v135, 0.0
      %159 = vadd.xlane.f32.xlu0 %v158
      %v160 = vpop.xlane.xlu0 %159
      %v161 = vmax.f32 %v139, 1e-16
      %v162 = vmax.f32 %v142, 1e-16
      %v163 = vmax.f32 %v145, 1e-16
      %v164 = vmax.f32 %v148, 1e-16
      %v165 = vmax.f32 %v151, 1e-16
      %v166 = vmax.f32 %v154, 1e-16
      %v167 = vmax.f32 %v157, 1e-16
      %v168 = vmax.f32 %v160, 1e-16
      %v169 = vrsqrt.pop %v161
      %v170 = vrsqrt.pop %v162
      %v171 = vrsqrt.pop %v163
      %v172 = vrsqrt.pop %v164
      %v173 = vrsqrt.pop %v165
      %v174 = vrsqrt.pop %v166
      %v175 = vrsqrt.pop %v167
      %v176 = vrsqrt.pop %v168
      %v177 = vmul.f32 %v120, %v169
      %v178 = vmul.f32 %v121, %v170
      %v179 = vmul.f32 %v122, %v171
      %v180 = vmul.f32 %v123, %v172
      %v181 = vmul.f32 %v124, %v173
      %v182 = vmul.f32 %v125, %v174
      %v183 = vmul.f32 %v126, %v175
      %v184 = vmul.f32 %v127, %v176
      %185 = vst.msk [vmem:[%s118] sm:$0xff] %vm136, %v177
      %186 = vst.msk [vmem:[%s118 + $0x8] sm:$0xff] %vm136, %v178
      %187 = vst.msk [vmem:[%s118 + $0x10] sm:$0xff] %vm136, %v179
      %188 = vst.msk [vmem:[%s118 + $0x18] sm:$0xff] %vm136, %v180
      %189 = vst.msk [vmem:[%s118 + $0x20] sm:$0xff] %vm136, %v181
      %190 = vst.msk [vmem:[%s118 + $0x28] sm:$0xff] %vm136, %v182
      %191 = vst.msk [vmem:[%s118 + $0x30] sm:$0xff] %vm136, %v183
      %192 = vst.msk [vmem:[%s118 + $0x38] sm:$0xff] %vm136, %v184
      %s193 = smul.u32 8, %s12
      %p194 = scmp.lt.s32.totalorder %s193, 23
      %s195 = scalar_select %p194, %s193, 23
      %s196 = smul.addr %s195, 8
      %s197 = scalar_lea.vmem %s1, %s196
      // Predicated region
      $region25: #{tpu_custom_call.1} parent=23 // pred_check
        %p198 = pneg %p56
      $region26: #{tpu_custom_call.1} parent=23 // pred_check_branch
        %200 = sbr.rel (%p198) target = $region28
      $region27: #{tpu_custom_call.1} parent=23 // pred_region
        %s201 = smul.u32 8, %s12
      $region28: #{tpu_custom_call.1} parent=23 // pred_fallthru
        _
    $region24: #{tpu_custom_call.1} parent=5 // pred_fallthru
      _
    %p202 = scmp.le.s32.totalorder 2, %s7
    // Predicated region
    $region29: #{tpu_custom_call.1} parent=5 // pred_check
      %p203 = pneg %p202
    $region30: #{tpu_custom_call.1} parent=5 // pred_check_branch
      %205 = sbr.rel (%p203) target = $region32
    $region31: #{tpu_custom_call.1} parent=5 // pred_region
      %s206 = ssub.s32 %s7, 2
      // Predicated region
      $region33: #{tpu_custom_call.1} parent=31 // pred_check
        %p207 = pneg %p62
      $region34: #{tpu_custom_call.1} parent=31 // pred_check_branch
        %209 = sbr.rel (%p207) target = $region36
      $region35: #{tpu_custom_call.1} parent=31 // pred_region
        %s210 = smul.u32 8, %s13
        %p211 = scmp.lt.s32.totalorder %s210, 23
        %s212 = scalar_select %p211, %s210, 23
        %s213 = smul.addr %s212, 8
        %s214 = scalar_lea.vmem %s1, %s213
      $region36: #{tpu_custom_call.1} parent=31 // pred_fallthru
        _
    $region32: #{tpu_custom_call.1} parent=5 // pred_fallthru
      _
  $region6: #{tpu_custom_call.1} parent=0 // loop_footer
    %s11 = sadd.s32 1, %s7
  $region7: #{tpu_custom_call.1} parent=0 // loop_footer_branch
    %6 = sbr.rel target = $region3
  $region8: #{tpu_custom_call.1} parent=0 // loop_exit
    _

</llo_original>
